<compile_context>
chip_gen: v5e
topology: v5e:2x2
jax: 0.10.0
libtpu: 0.0.40
codegen_flags: <defaults>
</compile_context>

<pallas_src>
import functools

import jax
import jax.numpy as jnp
from jax import lax
from jax.experimental import pallas as pl
from jax.experimental.pallas import tpu as pltpu


# ---------------------------------------------------------------------------
# Pallas kernel: one grid step processes `nb` whole batch items in NCL layout.
# ---------------------------------------------------------------------------
def inception_kernel(x_ref, wf_ref, bf_ref, wbd_ref, bbd_ref, o_ref,
                     *, c1, r3p, r5p):
    nb, C_in, L = x_ref.shape

    wf = wf_ref[...]          # (c1 + r3p + r5p, C_in)     fused stage-1 1x1 weights
    bf = bf_ref[...]          # (c1 + r3p + r5p, 1)
    wbd = wbd_ref[...]        # (c2+c3+c4, 3*r3p + 5*r5p + C_in)  block-diagonal stage-2
    bbd = bbd_ref[...]        # (c2+c3+c4, 1)

    # Hoisted per-column boundary masks for shifts d in {-2, -1, +1, +2}.
    j = lax.broadcasted_iota(jnp.int32, (1, L), 1)
    masks = {d: jnp.logical_and(j + d >= 0, j + d < L) for d in (-2, -1, 1, 2)}

    neg_inf = jnp.float32(-jnp.inf)

    def relu(z):
        return jnp.maximum(z, 0.0)

    def shifted(v, d, fill):
        # s[:, t] = v[:, t + d] if 0 <= t + d < L else `fill`.
        # The rotation runs on the XLU; wrap-around columns are masked out.
        if d == 0:
            return v
        rolled = pltpu.roll(v, shift=(-d) % L, axis=1)
        return jnp.where(masks[d], rolled, fill)

    for n in range(nb):                      # static unroll over items in this block
        xn = x_ref[n]                        # (C_in, L)

        # ---- Stage 1: fused 1x1 convs (branch1 + branch2/3 reductions), one MXU op ----
        h = relu(jnp.dot(wf, xn, preferred_element_type=jnp.float32) + bf)
        br1 = h[0:c1, :]
        h2 = h[c1:c1 + r3p, :]
        h3 = h[c1 + r3p:c1 + r3p + r5p, :]

        # ---- Branch-4 maxpool(k=3, s=1, pad=1) with -inf padding ----
        pooled = jnp.maximum(jnp.maximum(shifted(xn, -1, neg_inf), xn),
                             shifted(xn, 1, neg_inf))

        # ---- Stage 2: ONE block-diagonal matmul covering branches 2, 3 and 4 ----
        slab = jnp.concatenate(
            [shifted(h2, k - 1, 0.0) for k in range(3)]       # im2col, 3-tap (pad=1)
            + [shifted(h3, k - 2, 0.0) for k in range(5)]     # im2col, 5-tap (pad=2)
            + [pooled],                                       # branch-4 1x1 input
            axis=0)                                           # (3*r3p + 5*r5p + C_in, L)
        br234 = relu(jnp.dot(wbd, slab, preferred_element_type=jnp.float32) + bbd)

        # ---- channel concat (torch.cat along dim=1), written straight in NCL ----
        o_ref[n, 0:c1, :] = br1
        o_ref[n, c1:, :] = br234


# ---------------------------------------------------------------------------
# Param packing (PyTorch Conv1d layout -> fused kernel layout)
# ---------------------------------------------------------------------------
def _round_up(v, m):
    return (v + m - 1) // m * m


def pack_params(torch_params):
    (w1, b1, w2a, b2a, w2b, b2b, w3a, b3a, w3b, b3b, w4, b4) = torch_params
    c1, C_in = w1.shape[0], w1.shape[1]
    c2, c3, c4 = w2b.shape[0], w3b.shape[0], w4.shape[0]
    r3, r5 = w2a.shape[0], w3a.shape[0]
    r3p, r5p = _round_up(r3, 8), _round_up(r5, 8)     # sublane-align reduce channels

    def pad_rows(a, rows):
        return jnp.pad(a, ((0, rows - a.shape[0]),) + ((0, 0),) * (a.ndim - 1))

    # Stage-1 fused 1x1 weights/biases: [branch1 | branch2-reduce | branch3-reduce].
    wf = jnp.concatenate(
        [w1[:, :, 0], pad_rows(w2a[:, :, 0], r3p), pad_rows(w3a[:, :, 0], r5p)], axis=0)
    bf = jnp.concatenate([b1, pad_rows(b2a, r3p), pad_rows(b3a, r5p)], axis=0)[:, None]

    # Stage-2 block-diagonal weight: rows = [branch2 | branch3 | branch4],
    # cols  = [3 taps x r3p | 5 taps x r5p | C_in];  W2[o, k*red + c] = w[o, c, k].
    w2b_p = jnp.pad(w2b, ((0, 0), (0, r3p - r3), (0, 0)))
    w3b_p = jnp.pad(w3b, ((0, 0), (0, r5p - r5), (0, 0)))
    w2b_i = jnp.transpose(w2b_p, (0, 2, 1)).reshape(c2, 3 * r3p)
    w3b_i = jnp.transpose(w3b_p, (0, 2, 1)).reshape(c3, 5 * r5p)
    K2, K3, K4 = 3 * r3p, 5 * r5p, C_in
    wbd = jnp.zeros((c2 + c3 + c4, K2 + K3 + K4), jnp.float32)
    wbd = wbd.at[0:c2, 0:K2].set(w2b_i)
    wbd = wbd.at[c2:c2 + c3, K2:K2 + K3].set(w3b_i)
    wbd = wbd.at[c2 + c3:, K2 + K3:].set(w4[:, :, 0])
    bbd = jnp.concatenate([b2b, b3b, b4], axis=0)[:, None]

    packed = (wf, bf, wbd, bbd)
    meta = dict(c1=c1, r3p=r3p, r5p=r5p)
    return packed, meta


# ---------------------------------------------------------------------------
# Wrapper
# ---------------------------------------------------------------------------
def _vmem_limit_bytes():
    phys = 64 << 20
    try:
        info = pltpu.get_tpu_info()
        phys = int(getattr(info, "vmem_capacity_bytes", phys))
    except Exception:
        pass
    # Leave headroom: half of physical, capped at 64 MiB (v5e/v6e: 64 MiB; v7x: 32 MiB).
    return min(phys // 2, 64 << 20)


def _pick_items_per_step(N, C_in, L, c1, r3p, r5p, C_total, weight_elems, vmem_budget):
    """Items per grid step: >=2 pipelined/parallel steps, ~512+ lanes of work per
    step, and (input + output blocks double-buffered + in-kernel temporaries +
    weights) within the VMEM budget."""
    Kc = 3 * r3p + 5 * r5p + C_in
    tmp_rows = (c1 + r3p + r5p) + Kc + C_in + C_total   # h + slab + pooled + branch outs

    def vmem_bytes(nb):
        return 4 * (2 * nb * C_in * L            # x block, double-buffered
                    + 2 * nb * C_total * L       # out block, double-buffered
                    + nb * tmp_rows * L          # in-kernel temporaries (conservative)
                    + 2 * weight_elems)          # weight/bias refs, double-buffered

    min_steps = 2 if N >= 2 else 1
    cands = [nb for nb in range(1, N + 1)
             if N % nb == 0 and N // nb >= min_steps and vmem_bytes(nb) <= vmem_budget]
    if not cands:
        return 1
    wide = [nb for nb in cands if nb * L >= 512]
    # Smallest group that amortizes per-step overhead -> max number of pipelined steps;
    # otherwise the largest group that still leaves >=2 steps.
    return min(wide) if wide else max(cands)


def inception_forward(x, packed, meta):
    wf, bf, wbd, bbd = packed
    N, C_in, L = x.shape
    c1, r3p, r5p = meta["c1"], meta["r3p"], meta["r5p"]
    c234, Kc = wbd.shape
    C_total = c1 + c234

    vmem_limit = _vmem_limit_bytes()
    weight_elems = wf.size + bf.size + wbd.size + bbd.size
    nb = _pick_items_per_step(N, C_in, L, c1, r3p, r5p, C_total,
                              weight_elems, int(0.75 * vmem_limit))
    grid = (N // nb,)

    def full2d(a):
        return pl.BlockSpec(a.shape, lambda n: (0, 0))

    in_specs = [
        pl.BlockSpec((nb, C_in, L), lambda n: (n, 0, 0)),   # x in NCL, batch-grouped
        full2d(wf), full2d(bf), full2d(wbd), full2d(bbd),
    ]
    out_specs = pl.BlockSpec((nb, C_total, L), lambda n: (n, 0, 0))

    flops = 2 * N * L * (wf.shape[0] * C_in + c234 * Kc)
    bytes_accessed = 4 * (x.size + N * C_total * L + weight_elems)

    kernel = functools.partial(inception_kernel, c1=c1, r3p=r3p, r5p=r5p)

    return pl.pallas_call(
        kernel,
        out_shape=jax.ShapeDtypeStruct((N, C_total, L), jnp.float32),
        grid_spec=pltpu.PrefetchScalarGridSpec(
            num_scalar_prefetch=0,
            grid=grid,
            in_specs=in_specs,
            out_specs=out_specs,
        ),
        compiler_params=pltpu.CompilerParams(
            dimension_semantics=("parallel",),
            vmem_limit_bytes=vmem_limit),
        cost_estimate=pl.CostEstimate(flops=flops, transcendentals=0,
                                      bytes_accessed=bytes_accessed),
    )(x, wf, bf, wbd, bbd)


# ---------------------------------------------------------------------------
# Pure-JAX reference (mirrors the PyTorch forward) for correctness checking
# ---------------------------------------------------------------------------
def conv1d_ref(x, w, b, padding):
    y = lax.conv_general_dilated(
        x, w, window_strides=(1,), padding=[(padding, padding)],
        dimension_numbers=("NCH", "OIH", "NCH"))
    return y + b[None, :, None]


def inception_ref(x, torch_params):
    (w1, b1, w2a, b2a, w2b, b2b, w3a, b3a, w3b, b3b, w4, b4) = torch_params
    relu = lambda z: jnp.maximum(z, 0.0)
    br1 = relu(conv1d_ref(x, w1, b1, 0))
    br2 = relu(conv1d_ref(relu(conv1d_ref(x, w2a, b2a, 0)), w2b, b2b, 1))
    br3 = relu(conv1d_ref(relu(conv1d_ref(x, w3a, b3a, 0)), w3b, b3b, 2))
    pooled = lax.reduce_window(x, -jnp.inf, lax.max,
                               (1, 1, 3), (1, 1, 1),
                               [(0, 0), (0, 0), (1, 1)])
    br4 = relu(conv1d_ref(pooled, w4, b4, 0))
    return jnp.concatenate([br1, br2, br3, br4], axis=1)


# ---------------------------------------------------------------------------
# Main
# ---------------------------------------------------------------------------
if __name__ == "__main__":
    # Module hyperparameters (small, TPU-friendly; L is a multiple of 128 so every
    # store/matmul is lane-dense and the grid gets >=2 pipelined "parallel" steps).
    N, C_in, L = 8, 16, 256
    out_1x1, red_3x3, out_3x3 = 8, 8, 16
    red_5x5, out_5x5, out_1x1pool = 4, 8, 8

    key = jax.random.PRNGKey(0)
    ks = jax.random.split(key, 13)

    def wn(k, shape, scale=0.1):
        return (scale * jax.random.normal(k, shape)).astype(jnp.float32)

    # PyTorch-layout parameters: conv weights (Cout, Cin, K), biases (Cout,)
    w1 = wn(ks[0], (out_1x1, C_in, 1));        b1 = wn(ks[1], (out_1x1,))
    w2a = wn(ks[2], (red_3x3, C_in, 1));       b2a = wn(ks[3], (red_3x3,))
    w2b = wn(ks[4], (out_3x3, red_3x3, 3));    b2b = wn(ks[5], (out_3x3,))
    w3a = wn(ks[6], (red_5x5, C_in, 1));       b3a = wn(ks[7], (red_5x5,))
    w3b = wn(ks[8], (out_5x5, red_5x5, 5));    b3b = wn(ks[9], (out_5x5,))
    w4 = wn(ks[10], (out_1x1pool, C_in, 1));   b4 = wn(ks[11], (out_1x1pool,))

    torch_params = (w1, b1, w2a, b2a, w2b, b2b, w3a, b3a, w3b, b3b, w4, b4)
    packed, meta = pack_params(torch_params)

    x = jax.random.normal(ks[12], (N, C_in, L), dtype=jnp.float32)

    out = inception_forward(x, packed, meta)
    out = jax.block_until_ready(out)

    ref = inception_ref(x, torch_params)
    expected_C = out_1x1 + out_3x3 + out_5x5 + out_1x1pool
    assert out.shape == (N, expected_C, L), out.shape
    assert jnp.allclose(out, ref, atol=1e-4, rtol=1e-4), (
        float(jnp.max(jnp.abs(out - ref))))

    print("KERNEL_OK")
</pallas_src>

<mosaic_0001>
module attributes {stable_mosaic.version = 11 : i64} {
  func.func @inception_kernel(%arg0: i32, %arg1: memref<2x16x256xf32, #tpu.memory_space<vmem>>, %arg2: memref<24x16xf32, #tpu.memory_space<vmem>>, %arg3: memref<24x1xf32, #tpu.memory_space<vmem>>, %arg4: memref<32x80xf32, #tpu.memory_space<vmem>>, %arg5: memref<32x1xf32, #tpu.memory_space<vmem>>, %arg6: memref<2x40x256xf32, #tpu.memory_space<vmem>>) attributes {dimension_semantics = [#tpu.dimension_semantics<parallel>], iteration_bounds = array<i64: 4>, scalar_prefetch = 0 : i64, scratch_operands = 0 : i64, tpu.core_type = #tpu.core_type<tc>, window_params = [{transform_indices = @transform_0, window_bounds = array<i64: 2, 16, 256>}, {pipeline_mode = #tpu.pipeline_mode<synchronous>, transform_indices = @transform_1, window_bounds = array<i64: 24, 16>}, {pipeline_mode = #tpu.pipeline_mode<synchronous>, transform_indices = @transform_2, window_bounds = array<i64: 24, 1>}, {pipeline_mode = #tpu.pipeline_mode<synchronous>, transform_indices = @transform_3, window_bounds = array<i64: 32, 80>}, {pipeline_mode = #tpu.pipeline_mode<synchronous>, transform_indices = @transform_4, window_bounds = array<i64: 32, 1>}, {transform_indices = @transform_5, window_bounds = array<i64: 2, 40, 256>}]} {
    %c0 = arith.constant 0 : index
    %c0_0 = arith.constant 0 : index
    %0 = vector.load %arg2[%c0, %c0_0] : memref<24x16xf32, #tpu.memory_space<vmem>>, vector<24x16xf32>
    %c0_1 = arith.constant 0 : index
    %c0_2 = arith.constant 0 : index
    %1 = vector.load %arg3[%c0_1, %c0_2] : memref<24x1xf32, #tpu.memory_space<vmem>>, vector<24x1xf32>
    %c0_3 = arith.constant 0 : index
    %c0_4 = arith.constant 0 : index
    %2 = vector.load %arg4[%c0_3, %c0_4] : memref<32x80xf32, #tpu.memory_space<vmem>>, vector<32x80xf32>
    %c0_5 = arith.constant 0 : index
    %c0_6 = arith.constant 0 : index
    %3 = vector.load %arg5[%c0_5, %c0_6] : memref<32x1xf32, #tpu.memory_space<vmem>>, vector<32x1xf32>
    %4 = tpu.iota {dimensions = array<i32: 1>} : vector<1x256xi32>
    %c-2_i32 = arith.constant -2 : i32
    %5 = vector.broadcast %c-2_i32 : i32 to vector<1x256xi32>
    %6 = arith.addi %4, %5 : vector<1x256xi32>
    %c0_i32 = arith.constant 0 : i32
    %7 = vector.broadcast %c0_i32 : i32 to vector<1x256xi32>
    %8 = arith.cmpi sge, %6, %7 : vector<1x256xi32>
    %c-2_i32_7 = arith.constant -2 : i32
    %9 = vector.broadcast %c-2_i32_7 : i32 to vector<1x256xi32>
    %10 = arith.addi %4, %9 : vector<1x256xi32>
    %c256_i32 = arith.constant 256 : i32
    %11 = vector.broadcast %c256_i32 : i32 to vector<1x256xi32>
    %12 = arith.cmpi slt, %10, %11 : vector<1x256xi32>
    %13 = arith.andi %8, %12 : vector<1x256xi1>
    %c-1_i32 = arith.constant -1 : i32
    %14 = vector.broadcast %c-1_i32 : i32 to vector<1x256xi32>
    %15 = arith.addi %4, %14 : vector<1x256xi32>
    %c0_i32_8 = arith.constant 0 : i32
    %16 = vector.broadcast %c0_i32_8 : i32 to vector<1x256xi32>
    %17 = arith.cmpi sge, %15, %16 : vector<1x256xi32>
    %c-1_i32_9 = arith.constant -1 : i32
    %18 = vector.broadcast %c-1_i32_9 : i32 to vector<1x256xi32>
    %19 = arith.addi %4, %18 : vector<1x256xi32>
    %c256_i32_10 = arith.constant 256 : i32
    %20 = vector.broadcast %c256_i32_10 : i32 to vector<1x256xi32>
    %21 = arith.cmpi slt, %19, %20 : vector<1x256xi32>
    %22 = arith.andi %17, %21 : vector<1x256xi1>
    %c1_i32 = arith.constant 1 : i32
    %23 = vector.broadcast %c1_i32 : i32 to vector<1x256xi32>
    %24 = arith.addi %4, %23 : vector<1x256xi32>
    %c0_i32_11 = arith.constant 0 : i32
    %25 = vector.broadcast %c0_i32_11 : i32 to vector<1x256xi32>
    %26 = arith.cmpi sge, %24, %25 : vector<1x256xi32>
    %c1_i32_12 = arith.constant 1 : i32
    %27 = vector.broadcast %c1_i32_12 : i32 to vector<1x256xi32>
    %28 = arith.addi %4, %27 : vector<1x256xi32>
    %c256_i32_13 = arith.constant 256 : i32
    %29 = vector.broadcast %c256_i32_13 : i32 to vector<1x256xi32>
    %30 = arith.cmpi slt, %28, %29 : vector<1x256xi32>
    %31 = arith.andi %26, %30 : vector<1x256xi1>
    %c2_i32 = arith.constant 2 : i32
    %32 = vector.broadcast %c2_i32 : i32 to vector<1x256xi32>
    %33 = arith.addi %4, %32 : vector<1x256xi32>
    %c0_i32_14 = arith.constant 0 : i32
    %34 = vector.broadcast %c0_i32_14 : i32 to vector<1x256xi32>
    %35 = arith.cmpi sge, %33, %34 : vector<1x256xi32>
    %c2_i32_15 = arith.constant 2 : i32
    %36 = vector.broadcast %c2_i32_15 : i32 to vector<1x256xi32>
    %37 = arith.addi %4, %36 : vector<1x256xi32>
    %c256_i32_16 = arith.constant 256 : i32
    %38 = vector.broadcast %c256_i32_16 : i32 to vector<1x256xi32>
    %39 = arith.cmpi slt, %37, %38 : vector<1x256xi32>
    %40 = arith.andi %35, %39 : vector<1x256xi1>
    %c0_17 = arith.constant 0 : index
    %c0_18 = arith.constant 0 : index
    %c0_19 = arith.constant 0 : index
    %41 = vector.load %arg1[%c0_17, %c0_18, %c0_19] : memref<2x16x256xf32, #tpu.memory_space<vmem>>, vector<1x16x256xf32>
    %42 = vector.shape_cast %41 : vector<1x16x256xf32> to vector<16x256xf32>
    %cst = arith.constant dense<0.000000e+00> : vector<24x256xf32>
    %43 = tpu.matmul %0, %42, %cst {dimension_numbers = #tpu.dot_dimension_numbers<[1], [0], [0], [1], [0, 0, 1, 1], [], []>} : vector<24x16xf32>, vector<16x256xf32>, vector<24x256xf32> -> vector<24x256xf32>
    %44 = vector.broadcast %1 : vector<24x1xf32> to vector<24x256xf32>
    %45 = arith.addf %43, %44 : vector<24x256xf32>
    %cst_20 = arith.constant 0.000000e+00 : f32
    %46 = vector.broadcast %cst_20 : f32 to vector<24x256xf32>
    %47 = arith.maximumf %45, %46 : vector<24x256xf32>
    %48 = vector.extract_strided_slice %47 {offsets = [0, 0], sizes = [8, 256], strides = [1, 1]} : vector<24x256xf32> to vector<8x256xf32>
    %49 = vector.extract_strided_slice %47 {offsets = [8, 0], sizes = [8, 256], strides = [1, 1]} : vector<24x256xf32> to vector<8x256xf32>
    %50 = vector.extract_strided_slice %47 {offsets = [16, 0], sizes = [8, 256], strides = [1, 1]} : vector<24x256xf32> to vector<8x256xf32>
    %c1_i32_21 = arith.constant 1 : i32
    %51 = tpu.dynamic_rotate %42 by %c1_i32_21 dim 1 : vector<16x256xf32>, i32 -> vector<16x256xf32>
    %cst_22 = arith.constant 0xFF800000 : f32
    %52 = vector.shape_cast %22 : vector<1x256xi1> to vector<1x256xi1>
    %53 = vector.broadcast %52 : vector<1x256xi1> to vector<16x256xi1>
    %54 = vector.broadcast %cst_22 : f32 to vector<16x256xf32>
    %55 = arith.select %53, %51, %54 : vector<16x256xi1>, vector<16x256xf32>
    %56 = arith.maximumf %55, %42 : vector<16x256xf32>
    %c255_i32 = arith.constant 255 : i32
    %57 = tpu.dynamic_rotate %42 by %c255_i32 dim 1 : vector<16x256xf32>, i32 -> vector<16x256xf32>
    %cst_23 = arith.constant 0xFF800000 : f32
    %58 = vector.shape_cast %31 : vector<1x256xi1> to vector<1x256xi1>
    %59 = vector.broadcast %58 : vector<1x256xi1> to vector<16x256xi1>
    %60 = vector.broadcast %cst_23 : f32 to vector<16x256xf32>
    %61 = arith.select %59, %57, %60 : vector<16x256xi1>, vector<16x256xf32>
    %62 = arith.maximumf %56, %61 : vector<16x256xf32>
    %c1_i32_24 = arith.constant 1 : i32
    %63 = tpu.dynamic_rotate %49 by %c1_i32_24 dim 1 : vector<8x256xf32>, i32 -> vector<8x256xf32>
    %cst_25 = arith.constant 0.000000e+00 : f32
    %64 = vector.shape_cast %22 : vector<1x256xi1> to vector<1x256xi1>
    %65 = vector.broadcast %64 : vector<1x256xi1> to vector<8x256xi1>
    %66 = vector.broadcast %cst_25 : f32 to vector<8x256xf32>
    %67 = arith.select %65, %63, %66 : vector<8x256xi1>, vector<8x256xf32>
    %c255_i32_26 = arith.constant 255 : i32
    %68 = tpu.dynamic_rotate %49 by %c255_i32_26 dim 1 : vector<8x256xf32>, i32 -> vector<8x256xf32>
    %cst_27 = arith.constant 0.000000e+00 : f32
    %69 = vector.shape_cast %31 : vector<1x256xi1> to vector<1x256xi1>
    %70 = vector.broadcast %69 : vector<1x256xi1> to vector<8x256xi1>
    %71 = vector.broadcast %cst_27 : f32 to vector<8x256xf32>
    %72 = arith.select %70, %68, %71 : vector<8x256xi1>, vector<8x256xf32>
    %c2_i32_28 = arith.constant 2 : i32
    %73 = tpu.dynamic_rotate %50 by %c2_i32_28 dim 1 : vector<8x256xf32>, i32 -> vector<8x256xf32>
    %cst_29 = arith.constant 0.000000e+00 : f32
    %74 = vector.shape_cast %13 : vector<1x256xi1> to vector<1x256xi1>
    %75 = vector.broadcast %74 : vector<1x256xi1> to vector<8x256xi1>
    %76 = vector.broadcast %cst_29 : f32 to vector<8x256xf32>
    %77 = arith.select %75, %73, %76 : vector<8x256xi1>, vector<8x256xf32>
    %c1_i32_30 = arith.constant 1 : i32
    %78 = tpu.dynamic_rotate %50 by %c1_i32_30 dim 1 : vector<8x256xf32>, i32 -> vector<8x256xf32>
    %cst_31 = arith.constant 0.000000e+00 : f32
    %79 = vector.shape_cast %22 : vector<1x256xi1> to vector<1x256xi1>
    %80 = vector.broadcast %79 : vector<1x256xi1> to vector<8x256xi1>
    %81 = vector.broadcast %cst_31 : f32 to vector<8x256xf32>
    %82 = arith.select %80, %78, %81 : vector<8x256xi1>, vector<8x256xf32>
    %c255_i32_32 = arith.constant 255 : i32
    %83 = tpu.dynamic_rotate %50 by %c255_i32_32 dim 1 : vector<8x256xf32>, i32 -> vector<8x256xf32>
    %cst_33 = arith.constant 0.000000e+00 : f32
    %84 = vector.shape_cast %31 : vector<1x256xi1> to vector<1x256xi1>
    %85 = vector.broadcast %84 : vector<1x256xi1> to vector<8x256xi1>
    %86 = vector.broadcast %cst_33 : f32 to vector<8x256xf32>
    %87 = arith.select %85, %83, %86 : vector<8x256xi1>, vector<8x256xf32>
    %c254_i32 = arith.constant 254 : i32
    %88 = tpu.dynamic_rotate %50 by %c254_i32 dim 1 : vector<8x256xf32>, i32 -> vector<8x256xf32>
    %cst_34 = arith.constant 0.000000e+00 : f32
    %89 = vector.shape_cast %40 : vector<1x256xi1> to vector<1x256xi1>
    %90 = vector.broadcast %89 : vector<1x256xi1> to vector<8x256xi1>
    %91 = vector.broadcast %cst_34 : f32 to vector<8x256xf32>
    %92 = arith.select %90, %88, %91 : vector<8x256xi1>, vector<8x256xf32>
    %93 = tpu.concatenate %67, %49, %72, %77, %82, %50, %87, %92, %62 in 0 : vector<8x256xf32>, vector<8x256xf32>, vector<8x256xf32>, vector<8x256xf32>, vector<8x256xf32>, vector<8x256xf32>, vector<8x256xf32>, vector<8x256xf32>, vector<16x256xf32> -> vector<80x256xf32>
    %cst_35 = arith.constant dense<0.000000e+00> : vector<32x256xf32>
    %94 = tpu.matmul %2, %93, %cst_35 {dimension_numbers = #tpu.dot_dimension_numbers<[1], [0], [0], [1], [0, 0, 1, 1], [], []>} : vector<32x80xf32>, vector<80x256xf32>, vector<32x256xf32> -> vector<32x256xf32>
    %95 = vector.broadcast %3 : vector<32x1xf32> to vector<32x256xf32>
    %96 = arith.addf %94, %95 : vector<32x256xf32>
    %cst_36 = arith.constant 0.000000e+00 : f32
    %97 = vector.broadcast %cst_36 : f32 to vector<32x256xf32>
    %98 = arith.maximumf %96, %97 : vector<32x256xf32>
    %c0_37 = arith.constant 0 : index
    %c0_38 = arith.constant 0 : index
    %c0_39 = arith.constant 0 : index
    %99 = vector.load %arg6[%c0_37, %c0_38, %c0_39] : memref<2x40x256xf32, #tpu.memory_space<vmem>>, vector<1x8x256xf32>
    %100 = vector.shape_cast %99 : vector<1x8x256xf32> to vector<8x256xf32>
    %101 = vector.shape_cast %48 : vector<8x256xf32> to vector<1x8x256xf32>
    tpu.vector_store %arg6[%c0_37, %c0_38, %c0_39], %101 {strides = array<i32>} : memref<2x40x256xf32, #tpu.memory_space<vmem>>, vector<1x8x256xf32>,
    %c0_40 = arith.constant 0 : index
    %c8 = arith.constant 8 : index
    %c0_41 = arith.constant 0 : index
    %102 = vector.load %arg6[%c0_40, %c8, %c0_41] : memref<2x40x256xf32, #tpu.memory_space<vmem>>, vector<1x32x256xf32>
    %103 = vector.shape_cast %102 : vector<1x32x256xf32> to vector<32x256xf32>
    %104 = vector.shape_cast %98 : vector<32x256xf32> to vector<1x32x256xf32>
    tpu.vector_store %arg6[%c0_40, %c8, %c0_41], %104 {strides = array<i32>} : memref<2x40x256xf32, #tpu.memory_space<vmem>>, vector<1x32x256xf32>,
    %c1 = arith.constant 1 : index
    %c0_42 = arith.constant 0 : index
    %c0_43 = arith.constant 0 : index
    %105 = vector.load %arg1[%c1, %c0_42, %c0_43] : memref<2x16x256xf32, #tpu.memory_space<vmem>>, vector<1x16x256xf32>
    %106 = vector.shape_cast %105 : vector<1x16x256xf32> to vector<16x256xf32>
    %cst_44 = arith.constant dense<0.000000e+00> : vector<24x256xf32>
    %107 = tpu.matmul %0, %106, %cst_44 {dimension_numbers = #tpu.dot_dimension_numbers<[1], [0], [0], [1], [0, 0, 1, 1], [], []>} : vector<24x16xf32>, vector<16x256xf32>, vector<24x256xf32> -> vector<24x256xf32>
    %108 = vector.broadcast %1 : vector<24x1xf32> to vector<24x256xf32>
    %109 = arith.addf %107, %108 : vector<24x256xf32>
    %cst_45 = arith.constant 0.000000e+00 : f32
    %110 = vector.broadcast %cst_45 : f32 to vector<24x256xf32>
    %111 = arith.maximumf %109, %110 : vector<24x256xf32>
    %112 = vector.extract_strided_slice %111 {offsets = [0, 0], sizes = [8, 256], strides = [1, 1]} : vector<24x256xf32> to vector<8x256xf32>
    %113 = vector.extract_strided_slice %111 {offsets = [8, 0], sizes = [8, 256], strides = [1, 1]} : vector<24x256xf32> to vector<8x256xf32>
    %114 = vector.extract_strided_slice %111 {offsets = [16, 0], sizes = [8, 256], strides = [1, 1]} : vector<24x256xf32> to vector<8x256xf32>
    %c1_i32_46 = arith.constant 1 : i32
    %115 = tpu.dynamic_rotate %106 by %c1_i32_46 dim 1 : vector<16x256xf32>, i32 -> vector<16x256xf32>
    %cst_47 = arith.constant 0xFF800000 : f32
    %116 = vector.shape_cast %22 : vector<1x256xi1> to vector<1x256xi1>
    %117 = vector.broadcast %116 : vector<1x256xi1> to vector<16x256xi1>
    %118 = vector.broadcast %cst_47 : f32 to vector<16x256xf32>
    %119 = arith.select %117, %115, %118 : vector<16x256xi1>, vector<16x256xf32>
    %120 = arith.maximumf %119, %106 : vector<16x256xf32>
    %c255_i32_48 = arith.constant 255 : i32
    %121 = tpu.dynamic_rotate %106 by %c255_i32_48 dim 1 : vector<16x256xf32>, i32 -> vector<16x256xf32>
    %cst_49 = arith.constant 0xFF800000 : f32
    %122 = vector.shape_cast %31 : vector<1x256xi1> to vector<1x256xi1>
    %123 = vector.broadcast %122 : vector<1x256xi1> to vector<16x256xi1>
    %124 = vector.broadcast %cst_49 : f32 to vector<16x256xf32>
    %125 = arith.select %123, %121, %124 : vector<16x256xi1>, vector<16x256xf32>
    %126 = arith.maximumf %120, %125 : vector<16x256xf32>
    %c1_i32_50 = arith.constant 1 : i32
    %127 = tpu.dynamic_rotate %113 by %c1_i32_50 dim 1 : vector<8x256xf32>, i32 -> vector<8x256xf32>
    %cst_51 = arith.constant 0.000000e+00 : f32
    %128 = vector.shape_cast %22 : vector<1x256xi1> to vector<1x256xi1>
    %129 = vector.broadcast %128 : vector<1x256xi1> to vector<8x256xi1>
    %130 = vector.broadcast %cst_51 : f32 to vector<8x256xf32>
    %131 = arith.select %129, %127, %130 : vector<8x256xi1>, vector<8x256xf32>
    %c255_i32_52 = arith.constant 255 : i32
    %132 = tpu.dynamic_rotate %113 by %c255_i32_52 dim 1 : vector<8x256xf32>, i32 -> vector<8x256xf32>
    %cst_53 = arith.constant 0.000000e+00 : f32
    %133 = vector.shape_cast %31 : vector<1x256xi1> to vector<1x256xi1>
    %134 = vector.broadcast %133 : vector<1x256xi1> to vector<8x256xi1>
    %135 = vector.broadcast %cst_53 : f32 to vector<8x256xf32>
    %136 = arith.select %134, %132, %135 : vector<8x256xi1>, vector<8x256xf32>
    %c2_i32_54 = arith.constant 2 : i32
    %137 = tpu.dynamic_rotate %114 by %c2_i32_54 dim 1 : vector<8x256xf32>, i32 -> vector<8x256xf32>
    %cst_55 = arith.constant 0.000000e+00 : f32
    %138 = vector.shape_cast %13 : vector<1x256xi1> to vector<1x256xi1>
    %139 = vector.broadcast %138 : vector<1x256xi1> to vector<8x256xi1>
    %140 = vector.broadcast %cst_55 : f32 to vector<8x256xf32>
    %141 = arith.select %139, %137, %140 : vector<8x256xi1>, vector<8x256xf32>
    %c1_i32_56 = arith.constant 1 : i32
    %142 = tpu.dynamic_rotate %114 by %c1_i32_56 dim 1 : vector<8x256xf32>, i32 -> vector<8x256xf32>
    %cst_57 = arith.constant 0.000000e+00 : f32
    %143 = vector.shape_cast %22 : vector<1x256xi1> to vector<1x256xi1>
    %144 = vector.broadcast %143 : vector<1x256xi1> to vector<8x256xi1>
    %145 = vector.broadcast %cst_57 : f32 to vector<8x256xf32>
    %146 = arith.select %144, %142, %145 : vector<8x256xi1>, vector<8x256xf32>
    %c255_i32_58 = arith.constant 255 : i32
    %147 = tpu.dynamic_rotate %114 by %c255_i32_58 dim 1 : vector<8x256xf32>, i32 -> vector<8x256xf32>
    %cst_59 = arith.constant 0.000000e+00 : f32
    %148 = vector.shape_cast %31 : vector<1x256xi1> to vector<1x256xi1>
    %149 = vector.broadcast %148 : vector<1x256xi1> to vector<8x256xi1>
    %150 = vector.broadcast %cst_59 : f32 to vector<8x256xf32>
    %151 = arith.select %149, %147, %150 : vector<8x256xi1>, vector<8x256xf32>
    %c254_i32_60 = arith.constant 254 : i32
    %152 = tpu.dynamic_rotate %114 by %c254_i32_60 dim 1 : vector<8x256xf32>, i32 -> vector<8x256xf32>
    %cst_61 = arith.constant 0.000000e+00 : f32
    %153 = vector.shape_cast %40 : vector<1x256xi1> to vector<1x256xi1>
    %154 = vector.broadcast %153 : vector<1x256xi1> to vector<8x256xi1>
    %155 = vector.broadcast %cst_61 : f32 to vector<8x256xf32>
    %156 = arith.select %154, %152, %155 : vector<8x256xi1>, vector<8x256xf32>
    %157 = tpu.concatenate %131, %113, %136, %141, %146, %114, %151, %156, %126 in 0 : vector<8x256xf32>, vector<8x256xf32>, vector<8x256xf32>, vector<8x256xf32>, vector<8x256xf32>, vector<8x256xf32>, vector<8x256xf32>, vector<8x256xf32>, vector<16x256xf32> -> vector<80x256xf32>
    %cst_62 = arith.constant dense<0.000000e+00> : vector<32x256xf32>
    %158 = tpu.matmul %2, %157, %cst_62 {dimension_numbers = #tpu.dot_dimension_numbers<[1], [0], [0], [1], [0, 0, 1, 1], [], []>} : vector<32x80xf32>, vector<80x256xf32>, vector<32x256xf32> -> vector<32x256xf32>
    %159 = vector.broadcast %3 : vector<32x1xf32> to vector<32x256xf32>
    %160 = arith.addf %158, %159 : vector<32x256xf32>
    %cst_63 = arith.constant 0.000000e+00 : f32
    %161 = vector.broadcast %cst_63 : f32 to vector<32x256xf32>
    %162 = arith.maximumf %160, %161 : vector<32x256xf32>
    %c1_64 = arith.constant 1 : index
    %c0_65 = arith.constant 0 : index
    %c0_66 = arith.constant 0 : index
    %163 = vector.load %arg6[%c1_64, %c0_65, %c0_66] : memref<2x40x256xf32, #tpu.memory_space<vmem>>, vector<1x8x256xf32>
    %164 = vector.shape_cast %163 : vector<1x8x256xf32> to vector<8x256xf32>
    %165 = vector.shape_cast %112 : vector<8x256xf32> to vector<1x8x256xf32>
    tpu.vector_store %arg6[%c1_64, %c0_65, %c0_66], %165 {strides = array<i32>} : memref<2x40x256xf32, #tpu.memory_space<vmem>>, vector<1x8x256xf32>,
    %c1_67 = arith.constant 1 : index
    %c8_68 = arith.constant 8 : index
    %c0_69 = arith.constant 0 : index
    %166 = vector.load %arg6[%c1_67, %c8_68, %c0_69] : memref<2x40x256xf32, #tpu.memory_space<vmem>>, vector<1x32x256xf32>
    %167 = vector.shape_cast %166 : vector<1x32x256xf32> to vector<32x256xf32>
    %168 = vector.shape_cast %162 : vector<32x256xf32> to vector<1x32x256xf32>
    tpu.vector_store %arg6[%c1_67, %c8_68, %c0_69], %168 {strides = array<i32>} : memref<2x40x256xf32, #tpu.memory_space<vmem>>, vector<1x32x256xf32>,
    return
  }
  func.func @transform_0(%arg0: i32) -> (i32, i32, i32) {
    %c0_i32 = arith.constant 0 : i32
    %c0_i32_0 = arith.constant 0 : i32
    %c0_i32_1 = arith.constant 0 : i32
    return %arg0, %c0_i32, %c0_i32_0 : i32, i32, i32
  }
  func.func @transform_1(%arg0: i32) -> (i32, i32) {
    %c0_i32 = arith.constant 0 : i32
    %c0_i32_0 = arith.constant 0 : i32
    %c0_i32_1 = arith.constant 0 : i32
    return %c0_i32, %c0_i32_0 : i32, i32
  }
  func.func @transform_2(%arg0: i32) -> (i32, i32) {
    %c0_i32 = arith.constant 0 : i32
    %c0_i32_0 = arith.constant 0 : i32
    %c0_i32_1 = arith.constant 0 : i32
    return %c0_i32, %c0_i32_0 : i32, i32
  }
  func.func @transform_3(%arg0: i32) -> (i32, i32) {
    %c0_i32 = arith.constant 0 : i32
    %c0_i32_0 = arith.constant 0 : i32
    %c0_i32_1 = arith.constant 0 : i32
    return %c0_i32, %c0_i32_0 : i32, i32
  }
  func.func @transform_4(%arg0: i32) -> (i32, i32) {
    %c0_i32 = arith.constant 0 : i32
    %c0_i32_0 = arith.constant 0 : i32
    %c0_i32_1 = arith.constant 0 : i32
    return %c0_i32, %c0_i32_0 : i32, i32
  }
  func.func @transform_5(%arg0: i32) -> (i32, i32, i32) {
    %c0_i32 = arith.constant 0 : i32
    %c0_i32_0 = arith.constant 0 : i32
    %c0_i32_1 = arith.constant 0 : i32
    return %arg0, %c0_i32, %c0_i32_0 : i32, i32, i32
  }
}

</mosaic_0001>

<llo_original>
// kernel: tpu_custom_call.1
$region0: #{tpu_custom_call.1}
  #allocation0 [shape = 'u32[]', space=smem, size = 0x4, offset = 0x4, fixed_abs, tag = 'smem constant byte address 0x4 - core index']
  #allocation1 [shape = 'u32[72,128]{1,0:T(1,128)}', space=vmem, size = 0x9000, scoped, tag = 'internal scratch']
  %s0 = inlined_call_operand.hbm [shape: f32[8,16,256], index: 0, kind: input, shape index: {}]
  %s1 = inlined_call_operand.vmem [shape: f32[24,16], index: 1, kind: input, shape index: {}]
  %s2 = inlined_call_operand.vmem [shape: f32[24,1], index: 2, kind: input, shape index: {}]
  %s3 = inlined_call_operand.vmem [shape: f32[32,80], index: 3, kind: input, shape index: {}]
  %s4 = inlined_call_operand.vmem [shape: f32[32,1], index: 4, kind: input, shape index: {}]
  %s5 = inlined_call_operand.hbm [shape: f32[8,40,256], index: 5, kind: output, shape index: {}]
  %s6 = sld [smem:[#allocation0]]
  $region57: #{tpu_custom_call.1} parent=0
    _
  %s8 = ssub.s32 1, %s6
  %s9 = scalar_select 0, %s8, %s6
  $region1: #{tpu_custom_call.1} parent=0
    #allocation2 [shape = 'u8[65536]{0}', space=vmem, size = 0x10000, scoped, tag = 'input window, operand 0']
    #allocation3 [shape = 's32[2]{0}', space=sflag, size = 0x8, scoped, tag = 'scoped memory for tpu_custom_call.1']
    #allocation4 [shape = 's32[2]{0}', space=sflag, size = 0x8, scoped, tag = 'scoped memory for tpu_custom_call.1']
    #allocation5 [shape = 'u8[163840]{0}', space=vmem, size = 0x28000, scoped, tag = 'output window, operand 0']
    %10 = vsyncpa [#allocation3], 0
    %s11 = scalar_lea.sflag [#allocation3], 1
    %12 = vsyncpa %s11, 0
    %13 = vsyncpa [#allocation4], 0
    %s14 = scalar_lea.sflag [#allocation4], 1
    %15 = vsyncpa %s14, 0
    loop: start=0, step=1, limit=6
    $region2: #{tpu_custom_call.1} parent=1 // loop_pre_header
      _
    $region3: #{tpu_custom_call.1} parent=1 // loop_header
      %s17 = sphi 0, %s21
      %p18 = scmp.ge.s32.totalorder %s17, 6
      %s27 = sphi 0, %s29
      %s30 = sphi 0, %s27
      %s31 = sphi 0, %s30
      %s47 = sphi 0, %s31
      %s51 = sphi 0, %s51
      %s53 = sphi 0, %s51
      %s54 = sphi 0, %s53
      %s68 = sphi 0, %s54
      %s72 = sphi 0, %s72
      %s74 = sphi 0, %s72
      %s75 = sphi 0, %s74
      %s89 = sphi 0, %s75
      %s93 = sphi 0, %s93
      %s95 = sphi 0, %s93
      %s96 = sphi 0, %s95
      %s110 = sphi 0, %s96
      %s114 = sphi 0, %s114
      %s116 = sphi 0, %s114
      %s117 = sphi 0, %s116
      %s131 = sphi 0, %s117
      %s137 = sphi 0, %s139
      %s140 = sphi 0, %s137
      %s141 = sphi 0, %s140
      %s157 = sphi 0, %s141
    $region4: #{tpu_custom_call.1} parent=1 // loop_header_branch
      %20 = sbr.rel (%p18) target = $region8
    $region5: #{tpu_custom_call.1} parent=1 // loop_body
      %s22 = ssub.s32 %s17, 1
      %s23 = ssub.s32 %s17, 2
      %s24 = sadd.s32 %s17, 1
      %s25 = ssub.s32 %s17, %s24
      %p26 = scmp.eq.s32.totalorder %s25, 0
      %s28 = sadd.s32 %s27, 1
      %s29 = scalar_select %p26, %s27, %s28
      %p32 = pneg %p26
      %p33 = scmp.eq.s32.totalorder %s17, 3
      %p34 = por %p32, %p33
      %p35 = scmp.ne.s32.totalorder %s27, %s30
      %p36 = scmp.eq.s32.totalorder %s17, 0
      %p37 = por %p35, %p36
      %p38 = scmp.ne.s32.totalorder %s27, %s30
      %p39 = scmp.eq.s32.totalorder %s22, 3
      %p40 = por %p38, %p39
      %p41 = scmp.ne.s32.totalorder %s30, %s31
      %p42 = scmp.eq.s32.totalorder %s22, 0
      %p43 = por %p41, %p42
      %p44 = scmp.ne.s32.totalorder %s30, %s31
      %p45 = scmp.eq.s32.totalorder %s23, 3
      %p46 = por %p44, %p45
      %p48 = scmp.ne.s32.totalorder %s31, %s47
      %p49 = scmp.eq.s32.totalorder %s23, 0
      %p50 = por %p48, %p49
      %s52 = sadd.s32 %s51, 1
      %p55 = scmp.eq.s32.totalorder %s17, 3
      %p56 = scmp.ne.s32.totalorder %s51, %s53
      %p57 = scmp.eq.s32.totalorder %s17, 0
      %p58 = por %p56, %p57
      %p59 = scmp.ne.s32.totalorder %s51, %s53
      %p60 = scmp.eq.s32.totalorder %s22, 3
      %p61 = por %p59, %p60
      %p62 = scmp.ne.s32.totalorder %s53, %s54
      %p63 = scmp.eq.s32.totalorder %s22, 0
      %p64 = por %p62, %p63
      %p65 = scmp.ne.s32.totalorder %s53, %s54
      %p66 = scmp.eq.s32.totalorder %s23, 3
      %p67 = por %p65, %p66
      %p69 = scmp.ne.s32.totalorder %s54, %s68
      %p70 = scmp.eq.s32.totalorder %s23, 0
      %p71 = por %p69, %p70
      %s73 = sadd.s32 %s72, 1
      %p76 = scmp.eq.s32.totalorder %s17, 3
      %p77 = scmp.ne.s32.totalorder %s72, %s74
      %p78 = scmp.eq.s32.totalorder %s17, 0
      %p79 = por %p77, %p78
      %p80 = scmp.ne.s32.totalorder %s72, %s74
      %p81 = scmp.eq.s32.totalorder %s22, 3
      %p82 = por %p80, %p81
      %p83 = scmp.ne.s32.totalorder %s74, %s75
      %p84 = scmp.eq.s32.totalorder %s22, 0
      %p85 = por %p83, %p84
      %p86 = scmp.ne.s32.totalorder %s74, %s75
      %p87 = scmp.eq.s32.totalorder %s23, 3
      %p88 = por %p86, %p87
      %p90 = scmp.ne.s32.totalorder %s75, %s89
      %p91 = scmp.eq.s32.totalorder %s23, 0
      %p92 = por %p90, %p91
      %s94 = sadd.s32 %s93, 1
      %p97 = scmp.eq.s32.totalorder %s17, 3
      %p98 = scmp.ne.s32.totalorder %s93, %s95
      %p99 = scmp.eq.s32.totalorder %s17, 0
      %p100 = por %p98, %p99
      %p101 = scmp.ne.s32.totalorder %s93, %s95
      %p102 = scmp.eq.s32.totalorder %s22, 3
      %p103 = por %p101, %p102
      %p104 = scmp.ne.s32.totalorder %s95, %s96
      %p105 = scmp.eq.s32.totalorder %s22, 0
      %p106 = por %p104, %p105
      %p107 = scmp.ne.s32.totalorder %s95, %s96
      %p108 = scmp.eq.s32.totalorder %s23, 3
      %p109 = por %p107, %p108
      %p111 = scmp.ne.s32.totalorder %s96, %s110
      %p112 = scmp.eq.s32.totalorder %s23, 0
      %p113 = por %p111, %p112
      %s115 = sadd.s32 %s114, 1
      %p118 = scmp.eq.s32.totalorder %s17, 3
      %p119 = scmp.ne.s32.totalorder %s114, %s116
      %p120 = scmp.eq.s32.totalorder %s17, 0
      %p121 = por %p119, %p120
      %p122 = scmp.ne.s32.totalorder %s114, %s116
      %p123 = scmp.eq.s32.totalorder %s22, 3
      %p124 = por %p122, %p123
      %p125 = scmp.ne.s32.totalorder %s116, %s117
      %p126 = scmp.eq.s32.totalorder %s22, 0
      %p127 = por %p125, %p126
      %p128 = scmp.ne.s32.totalorder %s116, %s117
      %p129 = scmp.eq.s32.totalorder %s23, 3
      %p130 = por %p128, %p129
      %p132 = scmp.ne.s32.totalorder %s117, %s131
      %p133 = scmp.eq.s32.totalorder %s23, 0
      %p134 = por %p132, %p133
      %s135 = ssub.s32 %s17, %s24
      %p136 = scmp.eq.s32.totalorder %s135, 0
      %s138 = sadd.s32 %s137, 1
      %s139 = scalar_select %p136, %s137, %s138
      %p142 = pneg %p136
      %p143 = scmp.eq.s32.totalorder %s17, 3
      %p144 = por %p142, %p143
      %p145 = scmp.ne.s32.totalorder %s137, %s140
      %p146 = scmp.eq.s32.totalorder %s17, 0
      %p147 = por %p145, %p146
      %p148 = scmp.ne.s32.totalorder %s137, %s140
      %p149 = scmp.eq.s32.totalorder %s22, 3
      %p150 = por %p148, %p149
      %p151 = scmp.ne.s32.totalorder %s140, %s141
      %p152 = scmp.eq.s32.totalorder %s22, 0
      %p153 = por %p151, %p152
      %p154 = scmp.ne.s32.totalorder %s140, %s141
      %p155 = scmp.eq.s32.totalorder %s23, 3
      %p156 = por %p154, %p155
      %p158 = scmp.ne.s32.totalorder %s141, %s157
      %p159 = scmp.eq.s32.totalorder %s23, 0
      %p160 = por %p158, %p159
      %p161 = scmp.le.s32.totalorder 1, %s17
      %p162 = scmp.lt.s32.totalorder %s17, 5
      %p163 = pnand %p161, %p162
      %p164 = pneg %p163
      // Predicated region
      $region9: #{tpu_custom_call.1} parent=5 // pred_check
        _
      $region10: #{tpu_custom_call.1} parent=5 // pred_check_branch
        %166 = sbr.rel (%p163) target = $region12
      $region11: #{tpu_custom_call.1} parent=5 // pred_region
        %s167 = ssub.s32 %s17, 1
        // Predicated region
        $region13: #{tpu_custom_call.1} parent=11 // pred_check
          %p168 = pneg %p64
        $region14: #{tpu_custom_call.1} parent=11 // pred_check_branch
          %170 = sbr.rel (%p168) target = $region16
        $region15: #{tpu_custom_call.1} parent=11 // pred_region
          _
        $region16: #{tpu_custom_call.1} parent=11 // pred_fallthru
          _
        // Predicated region
        $region17: #{tpu_custom_call.1} parent=11 // pred_check
          %p171 = pneg %p85
        $region18: #{tpu_custom_call.1} parent=11 // pred_check_branch
          %173 = sbr.rel (%p171) target = $region20
        $region19: #{tpu_custom_call.1} parent=11 // pred_region
          _
        $region20: #{tpu_custom_call.1} parent=11 // pred_fallthru
          _
        // Predicated region
        $region21: #{tpu_custom_call.1} parent=11 // pred_check
          %p174 = pneg %p106
        $region22: #{tpu_custom_call.1} parent=11 // pred_check_branch
          %176 = sbr.rel (%p174) target = $region24
        $region23: #{tpu_custom_call.1} parent=11 // pred_region
          _
        $region24: #{tpu_custom_call.1} parent=11 // pred_fallthru
          _
        // Predicated region
        $region25: #{tpu_custom_call.1} parent=11 // pred_check
          %p177 = pneg %p127
        $region26: #{tpu_custom_call.1} parent=11 // pred_check_branch
          %179 = sbr.rel (%p177) target = $region28
        $region27: #{tpu_custom_call.1} parent=11 // pred_region
          _
        $region28: #{tpu_custom_call.1} parent=11 // pred_fallthru
          _
      $region12: #{tpu_custom_call.1} parent=5 // pred_fallthru
        _
      %p180 = scmp.lt.s32.totalorder %s17, 4
      // Predicated region
      $region29: #{tpu_custom_call.1} parent=5 // pred_check
        %p181 = pneg %p180
      $region30: #{tpu_custom_call.1} parent=5 // pred_check_branch
        %183 = sbr.rel (%p181) target = $region32
      $region31: #{tpu_custom_call.1} parent=5 // pred_region
        // Predicated region
        $region33: #{tpu_custom_call.1} parent=31 // pred_check
          %p184 = pneg %p37
        $region34: #{tpu_custom_call.1} parent=31 // pred_check_branch
          %186 = sbr.rel (%p184) target = $region36
        $region35: #{tpu_custom_call.1} parent=31 // pred_region
          %s187 = sand.u32 %s27, 1
          %s188 = scalar_lea.sflag [#allocation3], %s187
          %s189 = sand.u32 %s27, 1
          %s190 = smul.addr %s189, 64
          %s191 = scalar_lea.vmem [#allocation2], %s190
          %s192 = smul.u32 2, %s17
          %194 = vsyncadd %s188, 0
          %s195 = smul.addr %s192, 4
          %s196 = smul.addr %s195, 8
          %s197 = scalar_lea.hbm %s0, %s196
          %s198 = sshll.u32 %s197, 4
          %s199 = int_to_ptr.hbm [resolvable:$true] %s198
          %s200 = sshll.u32 %s191, 4
          %s201 = int_to_ptr.vmem [resolvable:$true] %s200
          %206 = dma.hbm_to_vmem [thread:$0]  %s199, 1024, %s201, %s188, 256, 256, 16
        $region36: #{tpu_custom_call.1} parent=31 // pred_fallthru
          _
      $region32: #{tpu_custom_call.1} parent=5 // pred_fallthru
        _
      %p207 = scmp.le.s32.totalorder 1, %s17
      %p208 = scmp.lt.s32.totalorder %s17, 5
      %p209 = pnand %p207, %p208
      %p210 = pneg %p209
      // Predicated region
      $region37: #{tpu_custom_call.1} parent=5 // pred_check
        _
      $region38: #{tpu_custom_call.1} parent=5 // pred_check_branch
        %212 = sbr.rel (%p209) target = $region40
      $region39: #{tpu_custom_call.1} parent=5 // pred_region
        %s213 = ssub.s32 %s17, 1
        %s214 = sand.u32 %s30, 1
        %s215 = scalar_lea.sflag [#allocation3], %s214
        %s216 = sand.u32 %s30, 1
        %s217 = smul.addr %s216, 64
        %s218 = scalar_lea.vmem [#allocation2], %s217
        // Predicated region
        $region41: #{tpu_custom_call.1} parent=39 // pred_check
          %p219 = pneg %p43
        $region42: #{tpu_custom_call.1} parent=39 // pred_check_branch
          %221 = sbr.rel (%p219) target = $region44
        $region43: #{tpu_custom_call.1} parent=39 // pred_region
          %223 = dma.done %s215, 1024
        $region44: #{tpu_custom_call.1} parent=39 // pred_fallthru
          _
        %s224 = sand.u32 %s30, 1
        %s225 = scalar_lea.sflag [#allocation3], %s224
        %s226 = sand.u32 %s30, 1
        %s227 = smul.addr %s226, 64
        %s228 = scalar_lea.vmem [#allocation2], %s227
        %p229 = pneg %p43
        %p230 = pneg %p40
        %p231 = pneg %p64
        %p232 = pneg %p61
        %p233 = pneg %p85
        %p234 = pneg %p82
        %p235 = pneg %p106
        %p236 = pneg %p103
        %p237 = pneg %p127
        %p238 = pneg %p124
        %p239 = pneg %p153
        %p240 = pneg %p150
        %s241 = sand.u32 %s140, 1
        %s242 = scalar_lea.sflag [#allocation4], %s241
        %s243 = sand.u32 %s140, 1
        %s244 = smul.addr %s243, 160
        %s245 = scalar_lea.vmem [#allocation5], %s244
        %s246 = smul.u32 2, %s22
        %s247 = smul.u32 2, %s22
        %v248 = vld [vmem:[%s1] sm:$0xff]
        %v249 = vld [vmem:[%s1 + $0x8] sm:$0xff]
        %v250 = vld [vmem:[%s1 + $0x10] sm:$0xff]
        %v251 = vld [vmem:[%s2] sm:$0xff]
        %v252 = vld [vmem:[%s2 + $0x8] sm:$0xff]
        %v253 = vld [vmem:[%s2 + $0x10] sm:$0xff]
        %v254 = vld [vmem:[%s3] sm:$0xff]
        %v255 = vld [vmem:[%s3 + $0x8] sm:$0xff]
        %v256 = vld [vmem:[%s3 + $0x10] sm:$0xff]
        %v257 = vld [vmem:[%s3 + $0x18] sm:$0xff]
        %v258 = vld [vmem:[%s4] sm:$0xff]
        %v259 = vld [vmem:[%s4 + $0x8] sm:$0xff]
        %v260 = vld [vmem:[%s4 + $0x10] sm:$0xff]
        %v261 = vld [vmem:[%s4 + $0x18] sm:$0xff]
        %v262 = vlaneseq
        %v263 = vand.u32 %v262, 127
        %v264 = vadd.s32 %v263, 128
        %v265 = vadd.s32 %v263, 4294967294
        %v266 = vadd.s32 %v264, 4294967294
        %vm267 = vcmp.ge.s32.totalorder %v265, 0
        %vm268 = vcmp.ge.s32.totalorder %v266, 0
        %vm269 = vcmp.lt.s32.totalorder %v265, 256
        %vm270 = vcmp.lt.s32.totalorder %v266, 256
        %vm271 = vmand %vm267, %vm269
        %vm272 = vmand %vm268, %vm270
        %v273 = vadd.s32 %v263, 4294967295
        %v274 = vadd.s32 %v264, 4294967295
        %vm275 = vcmp.ge.s32.totalorder %v273, 0
        %vm276 = vcmp.ge.s32.totalorder %v274, 0
        %vm277 = vcmp.lt.s32.totalorder %v273, 256
        %vm278 = vcmp.lt.s32.totalorder %v274, 256
        %vm279 = vmand %vm275, %vm277
        %vm280 = vmand %vm276, %vm278
        %v281 = vadd.s32 %v263, 1
        %v282 = vadd.s32 %v264, 1
        %vm283 = vcmp.ge.s32.totalorder %v281, 0
        %vm284 = vcmp.ge.s32.totalorder %v282, 0
        %vm285 = vcmp.lt.s32.totalorder %v281, 256
        %vm286 = vcmp.lt.s32.totalorder %v282, 256
        %vm287 = vmand %vm283, %vm285
        %vm288 = vmand %vm284, %vm286
        %v289 = vadd.s32 %v263, 2
        %v290 = vadd.s32 %v264, 2
        %vm291 = vcmp.ge.s32.totalorder %v289, 0
        %vm292 = vcmp.ge.s32.totalorder %v290, 0
        %vm293 = vcmp.lt.s32.totalorder %v289, 256
        %vm294 = vcmp.lt.s32.totalorder %v290, 256
        %vm295 = vmand %vm291, %vm293
        %vm296 = vmand %vm292, %vm294
        %v297 = vld [vmem:[%s218] sm:$0xff]
        %v298 = vld [vmem:[%s218 + $0x8] sm:$0xff]
        %v299 = vld [vmem:[%s218 + $0x10] sm:$0xff]
        %v300 = vld [vmem:[%s218 + $0x18] sm:$0xff]
        %302 = vset.pattern.permute.xlu0 0
        %303 = vperm.xlu0 %302, %v251
        %v304 = vpop.permute.xlu0 %303
        %307 = vset.pattern.permute.xlu0 0
        %308 = vperm.xlu0 %307, %v252
        %v309 = vpop.permute.xlu0 %308
        %312 = vset.pattern.permute.xlu0 0
        %313 = vperm.xlu0 %312, %v253
        %v314 = vpop.permute.xlu0 %313
        %vm316 = vcmask 130048
        %v318 = vsel %vm316, %v248, 0
        %v321 = vsel %vm316, %v249, 0
        %v324 = vsel %vm316, %v250, 0
        %326 = vmatpush.msra.mxu0 0.0
        %327 = vmatpush.msra.mxu0 0.0
        %328 = vmatpush.msra.mxu0 0.0
        %329 = vmatpush.msra.mxu0 0.0
        %330 = vmatpush.msra.mxu0 0.0
        %331 = vmatpush.msra.mxu0 0.0
        %332 = vmatpush.msra.mxu0 0.0
        %333 = vmatpush.msra.mxu0 0.0
        %334 = vmatpush.msra.mxu0 0.0
        %335 = vmatpush.msra.mxu0 0.0
        %336 = vmatpush.msra.mxu0 0.0
        %337 = vmatpush.msra.mxu0 0.0
        %338 = vmatpush.msra.mxu0 0.0
        %339 = vmatpush.msra.mxu0 0.0
        %340 = vmatpush.msra.mxu0 %v299
        %341 = vmatpush.msra.mxu0 %v297
        %342 = vmatmul.f32.gmra.mxu0 %v318
        %v343 = vpop.f32.mrf.mxu0
        %v344 = vadd.f32 %v304, %v343
        %345 = vmatmul.f32.gmra.mxu0 %v321
        %v346 = vpop.f32.mrf.mxu0
        %v347 = vadd.f32 %v309, %v346
        %348 = vmatmul.f32.gmra.mxu0 %v324
        %v349 = vpop.f32.mrf.mxu0
        %v350 = vadd.f32 %v314, %v349
        %351 = vdwg.mxu0
        %352 = vmatpush.msra.mxu0 0.0
        %353 = vmatpush.msra.mxu0 0.0
        %354 = vmatpush.msra.mxu0 0.0
        %355 = vmatpush.msra.mxu0 0.0
        %356 = vmatpush.msra.mxu0 0.0
        %357 = vmatpush.msra.mxu0 0.0
        %358 = vmatpush.msra.mxu0 0.0
        %359 = vmatpush.msra.mxu0 0.0
        %360 = vmatpush.msra.mxu0 0.0
        %361 = vmatpush.msra.mxu0 0.0
        %362 = vmatpush.msra.mxu0 0.0
        %363 = vmatpush.msra.mxu0 0.0
        %364 = vmatpush.msra.mxu0 0.0
        %365 = vmatpush.msra.mxu0 0.0
        %366 = vmatpush.msra.mxu0 %v300
        %367 = vmatpush.msra.mxu0 %v298
        %368 = vmatmul.f32.gmra.mxu0 %v318
        %v369 = vpop.f32.mrf.mxu0
        %v370 = vadd.f32 %v304, %v369
        %371 = vmatmul.f32.gmra.mxu0 %v321
        %v372 = vpop.f32.mrf.mxu0
        %v373 = vadd.f32 %v309, %v372
        %374 = vmatmul.f32.gmra.mxu0 %v324
        %v375 = vpop.f32.mrf.mxu0
        %v376 = vadd.f32 %v314, %v375
        %377 = vdwg.mxu0
        %v378 = vmax.f32 %v344, 0.0
        %v379 = vmax.f32 %v370, 0.0
        %v380 = vmax.f32 %v347, 0.0
        %v381 = vmax.f32 %v373, 0.0
        %v382 = vmax.f32 %v350, 0.0
        %v383 = vmax.f32 %v376, 0.0
        %384 = vrot.lane.b32.xlu0 %v297, 1
        %v385 = vpop.permute.xlu0 %384
        %386 = vrot.lane.b32.xlu0 %v299, 1
        %v387 = vpop.permute.xlu0 %386
        %388 = vrot.lane.b32.xlu0 %v298, 1
        %v389 = vpop.permute.xlu0 %388
        %390 = vrot.lane.b32.xlu0 %v300, 1
        %v391 = vpop.permute.xlu0 %390
        %vm392 = vcmp.lt.s32.totalorder %v263, 1
        %v393 = vsel %vm392, %v385, %v389
        %v394 = vsel %vm392, %v387, %v391
        %v395 = vsel %vm392, %v389, %v385
        %v396 = vsel %vm392, %v391, %v387
        %v397 = vsel %vm279, 1, 0
        %v398 = vsel %vm280, 1, 0
        %vm399 = vcmp.eq.s32.totalorder %v397, 1
        %vm400 = vcmp.eq.s32.totalorder %v398, 1
        %v401 = vsel %vm399, %v395, -inf
        %v402 = vsel %vm400, %v393, -inf
        %v403 = vsel %vm399, %v396, -inf
        %v404 = vsel %vm400, %v394, -inf
        %v405 = vmax.f32 %v401, %v297
        %v406 = vmax.f32 %v402, %v298
        %v407 = vmax.f32 %v403, %v299
        %v408 = vmax.f32 %v404, %v300
        %409 = vrot.lane.b32.xlu0 %v297, 127
        %v410 = vpop.permute.xlu0 %409
        %411 = vrot.lane.b32.xlu0 %v299, 127
        %v412 = vpop.permute.xlu0 %411
        %413 = vrot.lane.b32.xlu0 %v298, 127
        %v414 = vpop.permute.xlu0 %413
        %415 = vrot.lane.b32.xlu0 %v300, 127
        %v416 = vpop.permute.xlu0 %415
        %vm417 = vcmp.lt.s32.totalorder %v263, 127
        %v418 = vsel %vm417, %v410, %v414
        %v419 = vsel %vm417, %v412, %v416
        %v420 = vsel %vm417, %v414, %v410
        %v421 = vsel %vm417, %v416, %v412
        %v422 = vsel %vm287, 1, 0
        %v423 = vsel %vm288, 1, 0
        %vm424 = vcmp.eq.s32.totalorder %v422, 1
        %vm425 = vcmp.eq.s32.totalorder %v423, 1
        %v426 = vsel %vm424, %v418, -inf
        %v427 = vsel %vm425, %v420, -inf
        %v428 = vsel %vm424, %v419, -inf
        %v429 = vsel %vm425, %v421, -inf
        %v430 = vmax.f32 %v405, %v426
        %v431 = vmax.f32 %v406, %v427
        %v432 = vmax.f32 %v407, %v428
        %v433 = vmax.f32 %v408, %v429
        %434 = vrot.lane.b32.xlu0 %v380, 1
        %v435 = vpop.permute.xlu0 %434
        %436 = vrot.lane.b32.xlu0 %v381, 1
        %v437 = vpop.permute.xlu0 %436
        %v438 = vsel %vm392, %v435, %v437
        %v439 = vsel %vm392, %v437, %v435
        %v440 = vsel %vm399, %v439, 0.0
        %v441 = vsel %vm400, %v438, 0.0
        %442 = vrot.lane.b32.xlu0 %v380, 127
        %v443 = vpop.permute.xlu0 %442
        %444 = vrot.lane.b32.xlu0 %v381, 127
        %v445 = vpop.permute.xlu0 %444
        %v446 = vsel %vm417, %v443, %v445
        %v447 = vsel %vm417, %v445, %v443
        %v448 = vsel %vm424, %v446, 0.0
        %v449 = vsel %vm425, %v447, 0.0
        %450 = vrot.lane.b32.xlu0 %v382, 2
        %v451 = vpop.permute.xlu0 %450
        %452 = vrot.lane.b32.xlu0 %v383, 2
        %v453 = vpop.permute.xlu0 %452
        %vm454 = vcmp.lt.s32.totalorder %v263, 2
        %v455 = vsel %vm454, %v451, %v453
        %v456 = vsel %vm454, %v453, %v451
        %v457 = vsel %vm271, 1, 0
        %v458 = vsel %vm272, 1, 0
        %vm459 = vcmp.eq.s32.totalorder %v457, 1
        %vm460 = vcmp.eq.s32.totalorder %v458, 1
        %v461 = vsel %vm459, %v456, 0.0
        %v462 = vsel %vm460, %v455, 0.0
        %463 = vrot.lane.b32.xlu0 %v382, 1
        %v464 = vpop.permute.xlu0 %463
        %465 = vrot.lane.b32.xlu0 %v383, 1
        %v466 = vpop.permute.xlu0 %465
        %v467 = vsel %vm392, %v464, %v466
        %v468 = vsel %vm392, %v466, %v464
        %v469 = vsel %vm399, %v468, 0.0
        %v470 = vsel %vm400, %v467, 0.0
        %471 = vrot.lane.b32.xlu0 %v382, 127
        %v472 = vpop.permute.xlu0 %471
        %473 = vrot.lane.b32.xlu0 %v383, 127
        %v474 = vpop.permute.xlu0 %473
        %v475 = vsel %vm417, %v472, %v474
        %v476 = vsel %vm417, %v474, %v472
        %v477 = vsel %vm424, %v475, 0.0
        %v478 = vsel %vm425, %v476, 0.0
        %479 = vrot.lane.b32.xlu0 %v382, 126
        %v480 = vpop.permute.xlu0 %479
        %481 = vrot.lane.b32.xlu0 %v383, 126
        %v482 = vpop.permute.xlu0 %481
        %vm483 = vcmp.lt.s32.totalorder %v263, 126
        %v484 = vsel %vm483, %v480, %v482
        %v485 = vsel %vm483, %v482, %v480
        %v486 = vsel %vm295, 1, 0
        %v487 = vsel %vm296, 1, 0
        %vm488 = vcmp.eq.s32.totalorder %v486, 1
        %vm489 = vcmp.eq.s32.totalorder %v487, 1
        %v490 = vsel %vm488, %v484, 0.0
        %v491 = vsel %vm489, %v485, 0.0
        %493 = vset.pattern.permute.xlu0 0
        %494 = vperm.xlu0 %493, %v258
        %v495 = vpop.permute.xlu0 %494
        %498 = vset.pattern.permute.xlu0 0
        %499 = vperm.xlu0 %498, %v259
        %v500 = vpop.permute.xlu0 %499
        %503 = vset.pattern.permute.xlu0 0
        %504 = vperm.xlu0 %503, %v260
        %v505 = vpop.permute.xlu0 %504
        %508 = vset.pattern.permute.xlu0 0
        %509 = vperm.xlu0 %508, %v261
        %v510 = vpop.permute.xlu0 %509
        %vm512 = vcmask 654336
        %v514 = vsel %vm512, %v254, 0
        %v517 = vsel %vm512, %v255, 0
        %v520 = vsel %vm512, %v256, 0
        %v523 = vsel %vm512, %v257, 0
        %525 = vmatpush.msra.mxu0 0.0
        %526 = vmatpush.msra.mxu0 0.0
        %527 = vmatpush.msra.mxu0 0.0
        %528 = vmatpush.msra.mxu0 0.0
        %529 = vmatpush.msra.mxu0 0.0
        %530 = vmatpush.msra.mxu0 0.0
        %531 = vmatpush.msra.mxu0 %v432
        %532 = vmatpush.msra.mxu0 %v430
        %533 = vmatpush.msra.mxu0 %v490
        %534 = vmatpush.msra.mxu0 %v477
        %535 = vmatpush.msra.mxu0 %v382
        %536 = vmatpush.msra.mxu0 %v469
        %537 = vmatpush.msra.mxu0 %v461
        %538 = vmatpush.msra.mxu0 %v448
        %539 = vmatpush.msra.mxu0 %v380
        %540 = vmatpush.msra.mxu0 %v440
        %541 = vmatmul.f32.gmra.mxu0 %v514
        %v542 = vpop.f32.mrf.mxu0
        %v543 = vadd.f32 %v495, %v542
        %544 = vmatmul.f32.gmra.mxu0 %v517
        %v545 = vpop.f32.mrf.mxu0
        %v546 = vadd.f32 %v500, %v545
        %547 = vmatmul.f32.gmra.mxu0 %v520
        %v548 = vpop.f32.mrf.mxu0
        %v549 = vadd.f32 %v505, %v548
        %550 = vmatmul.f32.gmra.mxu0 %v523
        %v551 = vpop.f32.mrf.mxu0
        %v552 = vadd.f32 %v510, %v551
        %553 = vdwg.mxu0
        %554 = vmatpush.msra.mxu0 0.0
        %555 = vmatpush.msra.mxu0 0.0
        %556 = vmatpush.msra.mxu0 0.0
        %557 = vmatpush.msra.mxu0 0.0
        %558 = vmatpush.msra.mxu0 0.0
        %559 = vmatpush.msra.mxu0 0.0
        %560 = vmatpush.msra.mxu0 %v433
        %561 = vmatpush.msra.mxu0 %v431
        %562 = vmatpush.msra.mxu0 %v491
        %563 = vmatpush.msra.mxu0 %v478
        %564 = vmatpush.msra.mxu0 %v383
        %565 = vmatpush.msra.mxu0 %v470
        %566 = vmatpush.msra.mxu0 %v462
        %567 = vmatpush.msra.mxu0 %v449
        %568 = vmatpush.msra.mxu0 %v381
        %569 = vmatpush.msra.mxu0 %v441
        %570 = vmatmul.f32.gmra.mxu0 %v514
        %v571 = vpop.f32.mrf.mxu0
        %v572 = vadd.f32 %v495, %v571
        %573 = vmatmul.f32.gmra.mxu0 %v517
        %v574 = vpop.f32.mrf.mxu0
        %v575 = vadd.f32 %v500, %v574
        %576 = vmatmul.f32.gmra.mxu0 %v520
        %v577 = vpop.f32.mrf.mxu0
        %v578 = vadd.f32 %v505, %v577
        %579 = vmatmul.f32.gmra.mxu0 %v523
        %v580 = vpop.f32.mrf.mxu0
        %v581 = vadd.f32 %v510, %v580
        %582 = vdwg.mxu0
        %v583 = vmax.f32 %v543, 0.0
        %v584 = vmax.f32 %v572, 0.0
        %v585 = vmax.f32 %v546, 0.0
        %v586 = vmax.f32 %v575, 0.0
        %v587 = vmax.f32 %v549, 0.0
        %v588 = vmax.f32 %v578, 0.0
        %v589 = vmax.f32 %v552, 0.0
        %v590 = vmax.f32 %v581, 0.0
        %591 = vst [vmem:[%s245] sm:$0xff] %v378
        %592 = vst [vmem:[%s245 + $0x8] sm:$0xff] %v379
        %593 = vst [vmem:[%s245 + $0x10] sm:$0xff] %v583
        %594 = vst [vmem:[%s245 + $0x18] sm:$0xff] %v584
        %595 = vst [vmem:[%s245 + $0x20] sm:$0xff] %v585
        %596 = vst [vmem:[%s245 + $0x28] sm:$0xff] %v586
        %597 = vst [vmem:[%s245 + $0x30] sm:$0xff] %v587
        %598 = vst [vmem:[%s245 + $0x38] sm:$0xff] %v588
        %599 = vst [vmem:[%s245 + $0x40] sm:$0xff] %v589
        %600 = vst [vmem:[%s245 + $0x48] sm:$0xff] %v590
        %s601 = scalar_lea.vmem %s218, 32 [#allocation2]
        %v602 = vld [vmem:[%s601] sm:$0xff]
        %v603 = vld [vmem:[%s601 + $0x8] sm:$0xff]
        %v604 = vld [vmem:[%s601 + $0x10] sm:$0xff]
        %v605 = vld [vmem:[%s601 + $0x18] sm:$0xff]
        %606 = vmatpush.msra.mxu0 0.0
        %607 = vmatpush.msra.mxu0 0.0
        %608 = vmatpush.msra.mxu0 0.0
        %609 = vmatpush.msra.mxu0 0.0
        %610 = vmatpush.msra.mxu0 0.0
        %611 = vmatpush.msra.mxu0 0.0
        %612 = vmatpush.msra.mxu0 0.0
        %613 = vmatpush.msra.mxu0 0.0
        %614 = vmatpush.msra.mxu0 0.0
        %615 = vmatpush.msra.mxu0 0.0
        %616 = vmatpush.msra.mxu0 0.0
        %617 = vmatpush.msra.mxu0 0.0
        %618 = vmatpush.msra.mxu0 0.0
        %619 = vmatpush.msra.mxu0 0.0
        %620 = vmatpush.msra.mxu0 %v604
        %621 = vmatpush.msra.mxu0 %v602
        %622 = vmatmul.f32.gmra.mxu0 %v318
        %v623 = vpop.f32.mrf.mxu0
        %v624 = vadd.f32 %v304, %v623
        %625 = vmatmul.f32.gmra.mxu0 %v321
        %v626 = vpop.f32.mrf.mxu0
        %v627 = vadd.f32 %v309, %v626
        %628 = vmatmul.f32.gmra.mxu0 %v324
        %v629 = vpop.f32.mrf.mxu0
        %v630 = vadd.f32 %v314, %v629
        %631 = vdwg.mxu0
        %632 = vmatpush.msra.mxu0 0.0
        %633 = vmatpush.msra.mxu0 0.0
        %634 = vmatpush.msra.mxu0 0.0
        %635 = vmatpush.msra.mxu0 0.0
        %636 = vmatpush.msra.mxu0 0.0
        %637 = vmatpush.msra.mxu0 0.0
        %638 = vmatpush.msra.mxu0 0.0
        %639 = vmatpush.msra.mxu0 0.0
        %640 = vmatpush.msra.mxu0 0.0
        %641 = vmatpush.msra.mxu0 0.0
        %642 = vmatpush.msra.mxu0 0.0
        %643 = vmatpush.msra.mxu0 0.0
        %644 = vmatpush.msra.mxu0 0.0
        %645 = vmatpush.msra.mxu0 0.0
        %646 = vmatpush.msra.mxu0 %v605
        %647 = vmatpush.msra.mxu0 %v603
        %648 = vmatmul.f32.gmra.mxu0 %v318
        %v649 = vpop.f32.mrf.mxu0
        %v650 = vadd.f32 %v304, %v649
        %651 = vmatmul.f32.gmra.mxu0 %v321
        %v652 = vpop.f32.mrf.mxu0
        %v653 = vadd.f32 %v309, %v652
        %654 = vmatmul.f32.gmra.mxu0 %v324
        %v655 = vpop.f32.mrf.mxu0
        %v656 = vadd.f32 %v314, %v655
        %657 = vdwg.mxu0
        %v658 = vmax.f32 %v624, 0.0
        %v659 = vmax.f32 %v650, 0.0
        %v660 = vmax.f32 %v627, 0.0
        %v661 = vmax.f32 %v653, 0.0
        %v662 = vmax.f32 %v630, 0.0
        %v663 = vmax.f32 %v656, 0.0
        %664 = vrot.lane.b32.xlu0 %v602, 1
        %v665 = vpop.permute.xlu0 %664
        %666 = vrot.lane.b32.xlu0 %v604, 1
        %v667 = vpop.permute.xlu0 %666
        %668 = vrot.lane.b32.xlu0 %v603, 1
        %v669 = vpop.permute.xlu0 %668
        %670 = vrot.lane.b32.xlu0 %v605, 1
        %v671 = vpop.permute.xlu0 %670
        %v672 = vsel %vm392, %v665, %v669
        %v673 = vsel %vm392, %v667, %v671
        %v674 = vsel %vm392, %v669, %v665
        %v675 = vsel %vm392, %v671, %v667
        %v676 = vsel %vm399, %v674, -inf
        %v677 = vsel %vm400, %v672, -inf
        %v678 = vsel %vm399, %v675, -inf
        %v679 = vsel %vm400, %v673, -inf
        %v680 = vmax.f32 %v676, %v602
        %v681 = vmax.f32 %v677, %v603
        %v682 = vmax.f32 %v678, %v604
        %v683 = vmax.f32 %v679, %v605
        %684 = vrot.lane.b32.xlu0 %v602, 127
        %v685 = vpop.permute.xlu0 %684
        %686 = vrot.lane.b32.xlu0 %v604, 127
        %v687 = vpop.permute.xlu0 %686
        %688 = vrot.lane.b32.xlu0 %v603, 127
        %v689 = vpop.permute.xlu0 %688
        %690 = vrot.lane.b32.xlu0 %v605, 127
        %v691 = vpop.permute.xlu0 %690
        %v692 = vsel %vm417, %v685, %v689
        %v693 = vsel %vm417, %v687, %v691
        %v694 = vsel %vm417, %v689, %v685
        %v695 = vsel %vm417, %v691, %v687
        %v696 = vsel %vm424, %v692, -inf
        %v697 = vsel %vm425, %v694, -inf
        %v698 = vsel %vm424, %v693, -inf
        %v699 = vsel %vm425, %v695, -inf
        %v700 = vmax.f32 %v680, %v696
        %v701 = vmax.f32 %v681, %v697
        %v702 = vmax.f32 %v682, %v698
        %v703 = vmax.f32 %v683, %v699
        %704 = vrot.lane.b32.xlu0 %v660, 1
        %v705 = vpop.permute.xlu0 %704
        %706 = vrot.lane.b32.xlu0 %v661, 1
        %v707 = vpop.permute.xlu0 %706
        %v708 = vsel %vm392, %v705, %v707
        %v709 = vsel %vm392, %v707, %v705
        %v710 = vsel %vm399, %v709, 0.0
        %v711 = vsel %vm400, %v708, 0.0
        %712 = vrot.lane.b32.xlu0 %v660, 127
        %v713 = vpop.permute.xlu0 %712
        %714 = vrot.lane.b32.xlu0 %v661, 127
        %v715 = vpop.permute.xlu0 %714
        %v716 = vsel %vm417, %v713, %v715
        %v717 = vsel %vm417, %v715, %v713
        %v718 = vsel %vm424, %v716, 0.0
        %v719 = vsel %vm425, %v717, 0.0
        %720 = vrot.lane.b32.xlu0 %v662, 2
        %v721 = vpop.permute.xlu0 %720
        %722 = vrot.lane.b32.xlu0 %v663, 2
        %v723 = vpop.permute.xlu0 %722
        %v724 = vsel %vm454, %v721, %v723
        %v725 = vsel %vm454, %v723, %v721
        %v726 = vsel %vm459, %v725, 0.0
        %v727 = vsel %vm460, %v724, 0.0
        %728 = vrot.lane.b32.xlu0 %v662, 1
        %v729 = vpop.permute.xlu0 %728
        %730 = vrot.lane.b32.xlu0 %v663, 1
        %v731 = vpop.permute.xlu0 %730
        %v732 = vsel %vm392, %v729, %v731
        %v733 = vsel %vm392, %v731, %v729
        %v734 = vsel %vm399, %v733, 0.0
        %v735 = vsel %vm400, %v732, 0.0
        %736 = vrot.lane.b32.xlu0 %v662, 127
        %v737 = vpop.permute.xlu0 %736
        %738 = vrot.lane.b32.xlu0 %v663, 127
        %v739 = vpop.permute.xlu0 %738
        %v740 = vsel %vm417, %v737, %v739
        %v741 = vsel %vm417, %v739, %v737
        %v742 = vsel %vm424, %v740, 0.0
        %v743 = vsel %vm425, %v741, 0.0
        %744 = vrot.lane.b32.xlu0 %v662, 126
        %v745 = vpop.permute.xlu0 %744
        %746 = vrot.lane.b32.xlu0 %v663, 126
        %v747 = vpop.permute.xlu0 %746
        %v748 = vsel %vm483, %v745, %v747
        %v749 = vsel %vm483, %v747, %v745
        %v750 = vsel %vm488, %v748, 0.0
        %v751 = vsel %vm489, %v749, 0.0
        %752 = vmatpush.msra.mxu0 0.0
        %753 = vmatpush.msra.mxu0 0.0
        %754 = vmatpush.msra.mxu0 0.0
        %755 = vmatpush.msra.mxu0 0.0
        %756 = vmatpush.msra.mxu0 0.0
        %757 = vmatpush.msra.mxu0 0.0
        %758 = vmatpush.msra.mxu0 %v702
        %759 = vmatpush.msra.mxu0 %v700
        %760 = vmatpush.msra.mxu0 %v750
        %761 = vmatpush.msra.mxu0 %v742
        %762 = vmatpush.msra.mxu0 %v662
        %763 = vmatpush.msra.mxu0 %v734
        %764 = vmatpush.msra.mxu0 %v726
        %765 = vmatpush.msra.mxu0 %v718
        %766 = vmatpush.msra.mxu0 %v660
        %767 = vmatpush.msra.mxu0 %v710
        %768 = vmatmul.f32.gmra.mxu0 %v514
        %v769 = vpop.f32.mrf.mxu0
        %v770 = vadd.f32 %v495, %v769
        %771 = vmatmul.f32.gmra.mxu0 %v517
        %v772 = vpop.f32.mrf.mxu0
        %v773 = vadd.f32 %v500, %v772
        %774 = vmatmul.f32.gmra.mxu0 %v520
        %v775 = vpop.f32.mrf.mxu0
        %v776 = vadd.f32 %v505, %v775
        %777 = vmatmul.f32.gmra.mxu0 %v523
        %v778 = vpop.f32.mrf.mxu0
        %v779 = vadd.f32 %v510, %v778
        %780 = vdwg.mxu0
        %781 = vmatpush.msra.mxu0 0.0
        %782 = vmatpush.msra.mxu0 0.0
        %783 = vmatpush.msra.mxu0 0.0
        %784 = vmatpush.msra.mxu0 0.0
        %785 = vmatpush.msra.mxu0 0.0
        %786 = vmatpush.msra.mxu0 0.0
        %787 = vmatpush.msra.mxu0 %v703
        %788 = vmatpush.msra.mxu0 %v701
        %789 = vmatpush.msra.mxu0 %v751
        %790 = vmatpush.msra.mxu0 %v743
        %791 = vmatpush.msra.mxu0 %v663
        %792 = vmatpush.msra.mxu0 %v735
        %793 = vmatpush.msra.mxu0 %v727
        %794 = vmatpush.msra.mxu0 %v719
        %795 = vmatpush.msra.mxu0 %v661
        %796 = vmatpush.msra.mxu0 %v711
        %797 = vmatmul.f32.gmra.mxu0 %v514
        %v798 = vpop.f32.mrf.mxu0
        %v799 = vadd.f32 %v495, %v798
        %800 = vmatmul.f32.gmra.mxu0 %v517
        %v801 = vpop.f32.mrf.mxu0
        %v802 = vadd.f32 %v500, %v801
        %803 = vmatmul.f32.gmra.mxu0 %v520
        %v804 = vpop.f32.mrf.mxu0
        %v805 = vadd.f32 %v505, %v804
        %806 = vmatmul.f32.gmra.mxu0 %v523
        %v807 = vpop.f32.mrf.mxu0
        %v808 = vadd.f32 %v510, %v807
        %809 = vdwg.mxu0
        %v810 = vmax.f32 %v770, 0.0
        %v811 = vmax.f32 %v799, 0.0
        %v812 = vmax.f32 %v773, 0.0
        %v813 = vmax.f32 %v802, 0.0
        %v814 = vmax.f32 %v776, 0.0
        %v815 = vmax.f32 %v805, 0.0
        %v816 = vmax.f32 %v779, 0.0
        %v817 = vmax.f32 %v808, 0.0
        %s818 = scalar_lea.vmem %s245, 80 [#allocation5]
        %819 = vst [vmem:[%s818] sm:$0xff] %v658
        %820 = vst [vmem:[%s818 + $0x8] sm:$0xff] %v659
        %821 = vst [vmem:[%s818 + $0x10] sm:$0xff] %v810
        %822 = vst [vmem:[%s818 + $0x18] sm:$0xff] %v811
        %823 = vst [vmem:[%s818 + $0x20] sm:$0xff] %v812
        %824 = vst [vmem:[%s818 + $0x28] sm:$0xff] %v813
        %825 = vst [vmem:[%s818 + $0x30] sm:$0xff] %v814
        %826 = vst [vmem:[%s818 + $0x38] sm:$0xff] %v815
        %827 = vst [vmem:[%s818 + $0x40] sm:$0xff] %v816
        %828 = vst [vmem:[%s818 + $0x48] sm:$0xff] %v817
        %s829 = sand.u32 %s140, 1
        %s830 = scalar_lea.sflag [#allocation4], %s829
        %s831 = sand.u32 %s140, 1
        %s832 = smul.addr %s831, 160
        %s833 = scalar_lea.vmem [#allocation5], %s832
        // Predicated region
        $region45: #{tpu_custom_call.1} parent=39 // pred_check
          %p834 = pneg %p150
        $region46: #{tpu_custom_call.1} parent=39 // pred_check_branch
          %836 = sbr.rel (%p834) target = $region48
        $region47: #{tpu_custom_call.1} parent=39 // pred_region
          %s837 = smul.u32 2, %s22
          %839 = vsyncadd %s830, 0
          %s840 = smul.addr %s837, 10
          %s841 = smul.addr %s840, 8
          %s842 = scalar_lea.hbm %s5, %s841
          %s843 = sshll.u32 %s833, 4
          %s844 = int_to_ptr.vmem [resolvable:$true] %s843
          %s845 = sshll.u32 %s842, 4
          %s846 = int_to_ptr.hbm [resolvable:$true] %s845
          %851 = dma.vmem_to_hbm [thread:$0]  %s844, 2560, %s846, %s830, 256, 256, 16
        $region48: #{tpu_custom_call.1} parent=39 // pred_fallthru
          _
      $region40: #{tpu_custom_call.1} parent=5 // pred_fallthru
        _
      %p852 = scmp.le.s32.totalorder 2, %s17
      // Predicated region
      $region49: #{tpu_custom_call.1} parent=5 // pred_check
        %p853 = pneg %p852
      $region50: #{tpu_custom_call.1} parent=5 // pred_check_branch
        %855 = sbr.rel (%p853) target = $region52
      $region51: #{tpu_custom_call.1} parent=5 // pred_region
        %s856 = ssub.s32 %s17, 2
        // Predicated region
        $region53: #{tpu_custom_call.1} parent=51 // pred_check
          %p857 = pneg %p156
        $region54: #{tpu_custom_call.1} parent=51 // pred_check_branch
          %859 = sbr.rel (%p857) target = $region56
        $region55: #{tpu_custom_call.1} parent=51 // pred_region
          %s860 = sand.u32 %s141, 1
          %s861 = scalar_lea.sflag [#allocation4], %s860
          %s862 = sand.u32 %s141, 1
          %s863 = smul.addr %s862, 160
          %s864 = scalar_lea.vmem [#allocation5], %s863
          %866 = dma.done %s861, 2560
        $region56: #{tpu_custom_call.1} parent=51 // pred_fallthru
          _
      $region52: #{tpu_custom_call.1} parent=5 // pred_fallthru
        _
    $region6: #{tpu_custom_call.1} parent=1 // loop_footer
      %s21 = sadd.s32 1, %s17
    $region7: #{tpu_custom_call.1} parent=1 // loop_footer_branch
      %16 = sbr.rel target = $region3
    $region8: #{tpu_custom_call.1} parent=1 // loop_exit
      _
    %867 = vsyncpa [#allocation3], 1
    %s868 = scalar_lea.sflag [#allocation3], 1
    %869 = vsyncpa %s868, 1
    %870 = vsyncpa [#allocation4], 1
    %s871 = scalar_lea.sflag [#allocation4], 1
    %872 = vsyncpa %s871, 1

</llo_original>
